<compile_context>
chip_gen: v6e
topology: v6e:2x2x1
jax: 0.10.0
libtpu: 0.0.40
codegen_flags: <defaults>
</compile_context>

<pallas_src>
import functools

import jax
import jax.numpy as jnp
import numpy as np
from jax.experimental import pallas as pl
from jax.experimental.pallas import tpu as pltpu


def _vae_kernel(x_ref, eps_ref, w_ref, b_ref, out_ref, acc_bce_ref, acc_kl_ref,
                *, x_dim, h_dim, z_dim):
    """One feature-major batch tile of the VAE forward pass.

    x_ref   : (x_dim, tb)  transposed input tile (batch on lanes)
    eps_ref : (z_dim, tb)  transposed noise tile
    w_ref   : (2h+2z+x, w) packed transposed weights, resident in VMEM
    b_ref   : (2h+2z+x, 1) packed bias column vectors, resident in VMEM
    out_ref : (8, 128)     per-core output block; [0,0]=BCE sum, [0,1]=KL sum
    acc_*   : lane-dense per-core accumulators (full-vreg adds every step,
              reduced to scalars only at the last inner step)
    """
    i = pl.program_id(1)

    @pl.when(i == 0)
    def _():
        acc_bce_ref[...] = jnp.zeros_like(acc_bce_ref)
        acc_kl_ref[...] = jnp.zeros_like(acc_kl_ref)

    xT = x_ref[...]          # (x_dim, tb)
    epsT = eps_ref[...]      # (z_dim, tb)

    # Shared row partition of both slabs (offsets are multiples of 8 as long as
    # x_dim / h_dim / z_dim are multiples of 8 -> sublane aligned slices).
    o0 = 0
    o1 = o0 + h_dim          # x2h rows
    o2 = o1 + 2 * z_dim      # fused h2mu|h2var rows
    o3 = o2 + h_dim          # z2h rows
    o4 = o3 + x_dim          # h2x rows

    # ---- encoder: q(x) ----
    h = jnp.dot(w_ref[o0:o1, :x_dim], xT, preferred_element_type=jnp.float32)
    h = jnp.maximum(h + b_ref[o0:o1, :], 0.0)                       # (h_dim, tb)

    muvar = jnp.dot(w_ref[o1:o2, :h_dim], h,
                    preferred_element_type=jnp.float32) + b_ref[o1:o2, :]
    z_mu = muvar[:z_dim, :]                                         # (z_dim, tb)
    z_var = muvar[z_dim:, :]                                        # (z_dim, tb)

    # ---- reparameterization: sample_z ----
    s = jnp.exp(0.5 * z_var)       # exp(z_var/2); exp(z_var) reused below as s*s
    z = z_mu + s * epsT

    # ---- decoder: p(z) ----
    h2 = jnp.dot(w_ref[o2:o3, :z_dim], z, preferred_element_type=jnp.float32)
    h2 = jnp.maximum(h2 + b_ref[o2:o3, :], 0.0)                     # (h_dim, tb)
    logits = jnp.dot(w_ref[o3:o4, :h_dim], h2,
                     preferred_element_type=jnp.float32) + b_ref[o3:o4, :]

    # ---- BCE(sigmoid(logits), x) terms, stable softplus, PyTorch -100 clamp ----
    # log(sigmoid(l)) = -softplus(-l); log(1-sigmoid(l)) = -softplus(l)
    sp_neg = jnp.maximum(-logits, 0.0) + jnp.log(1.0 + jnp.exp(-jnp.abs(logits)))
    sp_pos = logits + sp_neg
    log_p = jnp.maximum(-sp_neg, -100.0)
    log_1mp = jnp.maximum(-sp_pos, -100.0)
    acc_bce_ref[...] += -(xT * log_p + (1.0 - xT) * log_1mp)

    # ---- KL terms: exp(var) + mu^2 - 1 - var ----
    acc_kl_ref[...] += s * s + z_mu * z_mu - 1.0 - z_var

    @pl.when(i == pl.num_programs(1) - 1)
    def _():
        bce_total = jnp.sum(acc_bce_ref[...])
        kl_total = 0.5 * jnp.sum(acc_kl_ref[...])
        row = jax.lax.broadcasted_iota(jnp.int32, out_ref.shape, 0)
        lane = jax.lax.broadcasted_iota(jnp.int32, out_ref.shape, 1)
        out_ref[...] = jnp.where(
            (row == 0) & (lane == 0), bce_total,
            jnp.where((row == 0) & (lane == 1), kl_total, 0.0))


def _pick_batch_tile(mb, x_dim, h_dim, z_dim, cap_override=None):
    """Largest batch tile (multiple of 128, within a VMEM budget) dividing mb."""
    if mb % 128 != 0:
        return mb                       # small / ragged batch: one full tile
    # Rough per-batch-column footprint: double-buffered inputs + activations
    # + the two lane-dense accumulators (all f32).
    bytes_per_col = 4 * (2 * (x_dim + z_dim) + 4 * h_dim + 6 * z_dim + 4 * x_dim)
    cap = (8 << 20) // max(bytes_per_col, 1)        # ~8 MiB tile budget
    cap = min(8192, max(128, (cap // 128) * 128))
    if cap_override is not None:
        cap = min(cap, max(128, (cap_override // 128) * 128))
    t = cap
    while t >= 128:
        if mb % t == 0:
            return t
        t -= 128
    return mb


def pack_params(params, x_dim, h_dim, z_dim):
    """Pack the 5 Linear layers (transposed) into one weight slab + one bias slab."""
    (w1, b1, wmu, bmu, wvar, bvar, w4, b4, w5, b5) = params
    width = max(x_dim, h_dim, z_dim)

    w1t = jnp.transpose(w1)                                    # (h_dim, x_dim)
    wmvt = jnp.transpose(jnp.concatenate([wmu, wvar], axis=1))  # (2*z_dim, h_dim)
    w4t = jnp.transpose(w4)                                    # (h_dim, z_dim)
    w5t = jnp.transpose(w5)                                    # (x_dim, h_dim)

    def pad_cols(a):
        return jnp.pad(a, ((0, 0), (0, width - a.shape[1])))

    w_slab = jnp.concatenate(
        [pad_cols(w1t), pad_cols(wmvt), pad_cols(w4t), pad_cols(w5t)],
        axis=0).astype(jnp.float32)                            # (2h+2z+x, width)
    b_slab = jnp.concatenate(
        [b1, jnp.concatenate([bmu, bvar]), b4, b5])[:, None].astype(jnp.float32)
    return w_slab, b_slab


def plain_vae_forward(x, eps, w_slab, b_slab, *, x_dim, h_dim, z_dim, tb_cap=None):
    """Runs the PlainVAE forward pass in one Pallas call; returns (recon_loss, kl_loss)."""
    mb = x.shape[0]
    # Feature-major (lane-dense) layout: batch sits on the 128-lane axis.
    # (Layout plumbing only; a real pipeline would produce x/eps feature-major.)
    xT = jnp.transpose(x).astype(jnp.float32)        # (x_dim, mb)
    epsT = jnp.transpose(eps).astype(jnp.float32)    # (z_dim, mb)

    tb = _pick_batch_tile(mb, x_dim, h_dim, z_dim, cap_override=tb_cap)
    steps = mb // tb
    nc = 2 if steps % 2 == 0 else 1      # feed both TensorCores on v7x
    inner = steps // nc

    kernel = functools.partial(_vae_kernel, x_dim=x_dim, h_dim=h_dim, z_dim=z_dim)

    out = pl.pallas_call(
        kernel,
        out_shape=jax.ShapeDtypeStruct((nc * 8, 128), jnp.float32),
        grid_spec=pltpu.PrefetchScalarGridSpec(
            num_scalar_prefetch=0,
            grid=(nc, inner),
            in_specs=[
                pl.BlockSpec((x_dim, tb), lambda c, i: (0, c * inner + i)),
                pl.BlockSpec((z_dim, tb), lambda c, i: (0, c * inner + i)),
                pl.BlockSpec(w_slab.shape, lambda c, i: (0, 0)),   # resident weights
                pl.BlockSpec(b_slab.shape, lambda c, i: (0, 0)),   # resident biases
            ],
            out_specs=pl.BlockSpec((8, 128), lambda c, i: (c, 0)),  # one row per core
            scratch_shapes=[
                pltpu.VMEM((x_dim, tb), jnp.float32),   # BCE term accumulator
                pltpu.VMEM((z_dim, tb), jnp.float32),   # KL term accumulator
            ],
        ),
        compiler_params=pltpu.CompilerParams(
            dimension_semantics=("parallel", "arbitrary")),
    )(xT, epsT, w_slab, b_slab)

    recon_loss = jnp.sum(out[:, 0]) / mb
    kl_loss = jnp.sum(out[:, 1]) / mb
    return recon_loss, kl_loss


def _reference_forward(x, eps, params):
    """Pure-JAX reference mirroring the PyTorch module."""
    (w1, b1, wmu, bmu, wvar, bvar, w4, b4, w5, b5) = params
    h = jax.nn.relu(x @ w1 + b1)
    mu = h @ wmu + bmu
    var = h @ wvar + bvar
    z = mu + jnp.exp(var / 2.0) * eps
    h2 = jax.nn.relu(z @ w4 + b4)
    x_rec = jax.nn.sigmoid(h2 @ w5 + b5)
    log_p = jnp.maximum(jnp.log(x_rec), -100.0)
    log_1mp = jnp.maximum(jnp.log(1.0 - x_rec), -100.0)
    recon = jnp.sum(-(x * log_p + (1.0 - x) * log_1mp)) / x.shape[0]
    kl = jnp.mean(0.5 * jnp.sum(jnp.exp(var) + mu ** 2 - 1.0 - var, axis=1))
    return recon, kl


if __name__ == "__main__":
    x_dim, h_dim, z_dim = 16, 32, 8

    key = jax.random.PRNGKey(0)
    k_data, *k_w = jax.random.split(key, 1 + 5)

    def init_linear(k, fan_in, fan_out):
        kw, kb = jax.random.split(k)
        w = jax.random.normal(kw, (fan_in, fan_out), dtype=jnp.float32) * 0.1
        b = jax.random.normal(kb, (fan_out,), dtype=jnp.float32) * 0.1
        return w, b

    w1, b1 = init_linear(k_w[0], x_dim, h_dim)      # x2h
    wmu, bmu = init_linear(k_w[1], h_dim, z_dim)    # h2mu
    wvar, bvar = init_linear(k_w[2], h_dim, z_dim)  # h2var
    w4, b4 = init_linear(k_w[3], z_dim, h_dim)      # z2h
    w5, b5 = init_linear(k_w[4], h_dim, x_dim)      # h2x
    params = (w1, b1, wmu, bmu, wvar, bvar, w4, b4, w5, b5)

    # Pack once (amortized across calls in a real training loop).
    w_slab, b_slab = pack_params(params, x_dim, h_dim, z_dim)

    def run_check(mb, seed, tb_cap=None):
        kx, ke = jax.random.split(jax.random.PRNGKey(seed))
        x = jax.random.uniform(kx, (mb, x_dim), dtype=jnp.float32)   # BCE targets in [0,1]
        eps = jax.random.normal(ke, (mb, z_dim), dtype=jnp.float32)
        recon, kl = plain_vae_forward(x, eps, w_slab, b_slab,
                                      x_dim=x_dim, h_dim=h_dim, z_dim=z_dim,
                                      tb_cap=tb_cap)
        jax.block_until_ready((recon, kl))
        recon_ref, kl_ref = _reference_forward(x, eps, params)
        assert np.allclose(np.asarray(recon), np.asarray(recon_ref),
                           rtol=1e-4, atol=1e-4), (recon, recon_ref)
        assert np.allclose(np.asarray(kl), np.asarray(kl_ref),
                           rtol=1e-4, atol=1e-4), (kl, kl_ref)

    # Small single-tile case (mirrors the module at tiny mb_size).
    run_check(mb=8, seed=1)
    # Multi-tile case: forces 2 parallel core-rows x 2 accumulation steps,
    # exercising the resident accumulators and the per-core output rows.
    run_check(mb=512, seed=2, tb_cap=128)

    print("KERNEL_OK")
</pallas_src>

<mosaic_0001>
module attributes {stable_mosaic.version = 11 : i64} {
  func.func @_vae_kernel(%arg0: i32, %arg1: i32, %arg2: memref<16x8xf32, #tpu.memory_space<vmem>>, %arg3: memref<8x8xf32, #tpu.memory_space<vmem>>, %arg4: memref<96x32xf32, #tpu.memory_space<vmem>>, %arg5: memref<96x1xf32, #tpu.memory_space<vmem>>, %arg6: memref<8x128xf32, #tpu.memory_space<vmem>>, %arg7: memref<16x8xf32, #tpu.memory_space<vmem>>, %arg8: memref<8x8xf32, #tpu.memory_space<vmem>>) attributes {dimension_semantics = [#tpu.dimension_semantics<parallel>, #tpu.dimension_semantics<arbitrary>], iteration_bounds = array<i64: 1, 1>, scalar_prefetch = 0 : i64, scratch_operands = 2 : i64, tpu.core_type = #tpu.core_type<tc>, window_params = [{transform_indices = @transform_0, window_bounds = array<i64: 16, 8>}, {transform_indices = @transform_1, window_bounds = array<i64: 8, 8>}, {pipeline_mode = #tpu.pipeline_mode<synchronous>, transform_indices = @transform_2, window_bounds = array<i64: 96, 32>}, {pipeline_mode = #tpu.pipeline_mode<synchronous>, transform_indices = @transform_3, window_bounds = array<i64: 96, 1>}, {transform_indices = @transform_4, window_bounds = array<i64: 8, 128>}]} {
    %c0_i32 = arith.constant 0 : i32
    %0 = arith.cmpi eq, %arg1, %c0_i32 : i32
    %1 = arith.extui %0 : i1 to i32
    %c0_i32_0 = arith.constant 0 : i32
    %2 = arith.cmpi ne, %1, %c0_i32_0 : i32
    scf.if %2 {
      %cst_44 = arith.constant 0.000000e+00 : f32
      %79 = vector.broadcast %cst_44 : f32 to vector<16x8xf32>
      %c0_45 = arith.constant 0 : index
      %c0_46 = arith.constant 0 : index
      %80 = vector.load %arg7[%c0_45, %c0_46] : memref<16x8xf32, #tpu.memory_space<vmem>>, vector<16x8xf32>
      tpu.vector_store %arg7[%c0_45, %c0_46], %79 {strides = array<i32>} : memref<16x8xf32, #tpu.memory_space<vmem>>, vector<16x8xf32>,
      %cst_47 = arith.constant 0.000000e+00 : f32
      %81 = vector.broadcast %cst_47 : f32 to vector<8x8xf32>
      %c0_48 = arith.constant 0 : index
      %c0_49 = arith.constant 0 : index
      %82 = vector.load %arg8[%c0_48, %c0_49] : memref<8x8xf32, #tpu.memory_space<vmem>>, vector<8x8xf32>
      tpu.vector_store %arg8[%c0_48, %c0_49], %81 {strides = array<i32>} : memref<8x8xf32, #tpu.memory_space<vmem>>, vector<8x8xf32>,
    } else {
    }
    %c0 = arith.constant 0 : index
    %c0_1 = arith.constant 0 : index
    %3 = vector.load %arg2[%c0, %c0_1] : memref<16x8xf32, #tpu.memory_space<vmem>>, vector<16x8xf32>
    %c0_2 = arith.constant 0 : index
    %c0_3 = arith.constant 0 : index
    %4 = vector.load %arg3[%c0_2, %c0_3] : memref<8x8xf32, #tpu.memory_space<vmem>>, vector<8x8xf32>
    %c0_4 = arith.constant 0 : index
    %c0_5 = arith.constant 0 : index
    %5 = vector.load %arg4[%c0_4, %c0_5] : memref<96x32xf32, #tpu.memory_space<vmem>>, vector<32x16xf32>
    %cst = arith.constant dense<0.000000e+00> : vector<32x8xf32>
    %6 = tpu.matmul %5, %3, %cst {dimension_numbers = #tpu.dot_dimension_numbers<[1], [0], [0], [1], [0, 0, 1, 1], [], []>} : vector<32x16xf32>, vector<16x8xf32>, vector<32x8xf32> -> vector<32x8xf32>
    %c0_6 = arith.constant 0 : index
    %c0_7 = arith.constant 0 : index
    %7 = vector.load %arg5[%c0_6, %c0_7] : memref<96x1xf32, #tpu.memory_space<vmem>>, vector<32x1xf32>
    %8 = vector.broadcast %7 : vector<32x1xf32> to vector<32x8xf32>
    %9 = arith.addf %6, %8 : vector<32x8xf32>
    %cst_8 = arith.constant 0.000000e+00 : f32
    %10 = vector.broadcast %cst_8 : f32 to vector<32x8xf32>
    %11 = arith.maximumf %9, %10 : vector<32x8xf32>
    %c32 = arith.constant 32 : index
    %c0_9 = arith.constant 0 : index
    %12 = vector.load %arg4[%c32, %c0_9] : memref<96x32xf32, #tpu.memory_space<vmem>>, vector<16x32xf32>
    %cst_10 = arith.constant dense<0.000000e+00> : vector<16x8xf32>
    %13 = tpu.matmul %12, %11, %cst_10 {dimension_numbers = #tpu.dot_dimension_numbers<[1], [0], [0], [1], [0, 0, 1, 1], [], []>} : vector<16x32xf32>, vector<32x8xf32>, vector<16x8xf32> -> vector<16x8xf32>
    %c32_11 = arith.constant 32 : index
    %c0_12 = arith.constant 0 : index
    %14 = vector.load %arg5[%c32_11, %c0_12] : memref<96x1xf32, #tpu.memory_space<vmem>>, vector<16x1xf32>
    %15 = vector.broadcast %14 : vector<16x1xf32> to vector<16x8xf32>
    %16 = arith.addf %13, %15 : vector<16x8xf32>
    %17 = vector.extract_strided_slice %16 {offsets = [0, 0], sizes = [8, 8], strides = [1, 1]} : vector<16x8xf32> to vector<8x8xf32>
    %18 = vector.extract_strided_slice %16 {offsets = [8, 0], sizes = [8, 8], strides = [1, 1]} : vector<16x8xf32> to vector<8x8xf32>
    %cst_13 = arith.constant 5.000000e-01 : f32
    %19 = vector.broadcast %cst_13 : f32 to vector<8x8xf32>
    %20 = arith.mulf %19, %18 : vector<8x8xf32>
    %21 = math.exp %20 : vector<8x8xf32>
    %22 = arith.mulf %21, %4 : vector<8x8xf32>
    %23 = arith.addf %17, %22 : vector<8x8xf32>
    %c48 = arith.constant 48 : index
    %c0_14 = arith.constant 0 : index
    %24 = vector.load %arg4[%c48, %c0_14] : memref<96x32xf32, #tpu.memory_space<vmem>>, vector<32x8xf32>
    %cst_15 = arith.constant dense<0.000000e+00> : vector<32x8xf32>
    %25 = tpu.matmul %24, %23, %cst_15 {dimension_numbers = #tpu.dot_dimension_numbers<[1], [0], [0], [1], [0, 0, 1, 1], [], []>} : vector<32x8xf32>, vector<8x8xf32>, vector<32x8xf32> -> vector<32x8xf32>
    %c48_16 = arith.constant 48 : index
    %c0_17 = arith.constant 0 : index
    %26 = vector.load %arg5[%c48_16, %c0_17] : memref<96x1xf32, #tpu.memory_space<vmem>>, vector<32x1xf32>
    %27 = vector.broadcast %26 : vector<32x1xf32> to vector<32x8xf32>
    %28 = arith.addf %25, %27 : vector<32x8xf32>
    %cst_18 = arith.constant 0.000000e+00 : f32
    %29 = vector.broadcast %cst_18 : f32 to vector<32x8xf32>
    %30 = arith.maximumf %28, %29 : vector<32x8xf32>
    %c80 = arith.constant 80 : index
    %c0_19 = arith.constant 0 : index
    %31 = vector.load %arg4[%c80, %c0_19] : memref<96x32xf32, #tpu.memory_space<vmem>>, vector<16x32xf32>
    %cst_20 = arith.constant dense<0.000000e+00> : vector<16x8xf32>
    %32 = tpu.matmul %31, %30, %cst_20 {dimension_numbers = #tpu.dot_dimension_numbers<[1], [0], [0], [1], [0, 0, 1, 1], [], []>} : vector<16x32xf32>, vector<32x8xf32>, vector<16x8xf32> -> vector<16x8xf32>
    %c80_21 = arith.constant 80 : index
    %c0_22 = arith.constant 0 : index
    %33 = vector.load %arg5[%c80_21, %c0_22] : memref<96x1xf32, #tpu.memory_space<vmem>>, vector<16x1xf32>
    %34 = vector.broadcast %33 : vector<16x1xf32> to vector<16x8xf32>
    %35 = arith.addf %32, %34 : vector<16x8xf32>
    %cst_23 = arith.constant 0.000000e+00 : f32
    %36 = vector.broadcast %cst_23 : f32 to vector<16x8xf32>
    %37 = arith.subf %36, %35 : vector<16x8xf32>
    %cst_24 = arith.constant 0.000000e+00 : f32
    %38 = vector.broadcast %cst_24 : f32 to vector<16x8xf32>
    %39 = arith.maximumf %37, %38 : vector<16x8xf32>
    %40 = math.absf %35 : vector<16x8xf32>
    %cst_25 = arith.constant 0.000000e+00 : f32
    %41 = vector.broadcast %cst_25 : f32 to vector<16x8xf32>
    %42 = arith.subf %41, %40 : vector<16x8xf32>
    %43 = math.exp %42 : vector<16x8xf32>
    %cst_26 = arith.constant 1.000000e+00 : f32
    %44 = vector.broadcast %cst_26 : f32 to vector<16x8xf32>
    %45 = arith.addf %44, %43 : vector<16x8xf32>
    %46 = math.log %45 : vector<16x8xf32>
    %47 = arith.addf %39, %46 : vector<16x8xf32>
    %48 = arith.addf %35, %47 : vector<16x8xf32>
    %cst_27 = arith.constant 0.000000e+00 : f32
    %49 = vector.broadcast %cst_27 : f32 to vector<16x8xf32>
    %50 = arith.subf %49, %47 : vector<16x8xf32>
    %cst_28 = arith.constant -1.000000e+02 : f32
    %51 = vector.broadcast %cst_28 : f32 to vector<16x8xf32>
    %52 = arith.maximumf %50, %51 : vector<16x8xf32>
    %cst_29 = arith.constant 0.000000e+00 : f32
    %53 = vector.broadcast %cst_29 : f32 to vector<16x8xf32>
    %54 = arith.subf %53, %48 : vector<16x8xf32>
    %cst_30 = arith.constant -1.000000e+02 : f32
    %55 = vector.broadcast %cst_30 : f32 to vector<16x8xf32>
    %56 = arith.maximumf %54, %55 : vector<16x8xf32>
    %c0_31 = arith.constant 0 : index
    %c0_32 = arith.constant 0 : index
    %57 = vector.load %arg7[%c0_31, %c0_32] : memref<16x8xf32, #tpu.memory_space<vmem>>, vector<16x8xf32>
    %58 = arith.mulf %3, %52 : vector<16x8xf32>
    %cst_33 = arith.constant 1.000000e+00 : f32
    %59 = vector.broadcast %cst_33 : f32 to vector<16x8xf32>
    %60 = arith.subf %59, %3 : vector<16x8xf32>
    %61 = arith.mulf %60, %56 : vector<16x8xf32>
    %62 = arith.addf %58, %61 : vector<16x8xf32>
    %cst_34 = arith.constant 0.000000e+00 : f32
    %63 = vector.broadcast %cst_34 : f32 to vector<16x8xf32>
    %64 = arith.subf %63, %62 : vector<16x8xf32>
    %65 = arith.addf %57, %64 : vector<16x8xf32>
    %c0_35 = arith.constant 0 : index
    %c0_36 = arith.constant 0 : index
    %66 = vector.load %arg7[%c0_35, %c0_36] : memref<16x8xf32, #tpu.memory_space<vmem>>, vector<16x8xf32>
    tpu.vector_store %arg7[%c0_35, %c0_36], %65 {strides = array<i32>} : memref<16x8xf32, #tpu.memory_space<vmem>>, vector<16x8xf32>,
    %c0_37 = arith.constant 0 : index
    %c0_38 = arith.constant 0 : index
    %67 = vector.load %arg8[%c0_37, %c0_38] : memref<8x8xf32, #tpu.memory_space<vmem>>, vector<8x8xf32>
    %68 = arith.mulf %21, %21 : vector<8x8xf32>
    %69 = arith.mulf %17, %17 : vector<8x8xf32>
    %70 = arith.addf %68, %69 : vector<8x8xf32>
    %cst_39 = arith.constant 1.000000e+00 : f32
    %71 = vector.broadcast %cst_39 : f32 to vector<8x8xf32>
    %72 = arith.subf %70, %71 : vector<8x8xf32>
    %73 = arith.subf %72, %18 : vector<8x8xf32>
    %74 = arith.addf %67, %73 : vector<8x8xf32>
    %c0_40 = arith.constant 0 : index
    %c0_41 = arith.constant 0 : index
    %75 = vector.load %arg8[%c0_40, %c0_41] : memref<8x8xf32, #tpu.memory_space<vmem>>, vector<8x8xf32>
    tpu.vector_store %arg8[%c0_40, %c0_41], %74 {strides = array<i32>} : memref<8x8xf32, #tpu.memory_space<vmem>>, vector<8x8xf32>,
    %c0_i32_42 = arith.constant 0 : i32
    %76 = arith.cmpi eq, %arg1, %c0_i32_42 : i32
    %77 = arith.extui %76 : i1 to i32
    %c0_i32_43 = arith.constant 0 : i32
    %78 = arith.cmpi ne, %77, %c0_i32_43 : i32
    scf.if %78 {
      %c0_44 = arith.constant 0 : index
      %c0_45 = arith.constant 0 : index
      %79 = vector.load %arg7[%c0_44, %c0_45] : memref<16x8xf32, #tpu.memory_space<vmem>>, vector<16x8xf32>
      %80 = vector.shape_cast %79 : vector<16x8xf32> to vector<1x16x8xf32>
      %cst_46 = arith.constant dense<0.000000e+00> : vector<1xf32>
      %81 = vector.multi_reduction <add>, %80, %cst_46 [1, 2] : vector<1x16x8xf32> to vector<1xf32>
      %82 = vector.shape_cast %81 : vector<1xf32> to vector<1x1x1xf32>
      %83 = vector.extract %82[0, 0, 0] : f32 from vector<1x1x1xf32>
      %c0_47 = arith.constant 0 : index
      %c0_48 = arith.constant 0 : index
      %84 = vector.load %arg8[%c0_47, %c0_48] : memref<8x8xf32, #tpu.memory_space<vmem>>, vector<8x8xf32>
      %85 = vector.shape_cast %84 : vector<8x8xf32> to vector<1x8x8xf32>
      %cst_49 = arith.constant dense<0.000000e+00> : vector<1xf32>
      %86 = vector.multi_reduction <add>, %85, %cst_49 [1, 2] : vector<1x8x8xf32> to vector<1xf32>
      %87 = vector.shape_cast %86 : vector<1xf32> to vector<1x1x1xf32>
      %88 = vector.extract %87[0, 0, 0] : f32 from vector<1x1x1xf32>
      %cst_50 = arith.constant 5.000000e-01 : f32
      %89 = arith.mulf %cst_50, %88 : f32
      %90 = tpu.iota {dimensions = array<i32: 0>} : vector<8x128xi32>
      %91 = tpu.iota {dimensions = array<i32: 1>} : vector<8x128xi32>
      %c0_i32_51 = arith.constant 0 : i32
      %92 = vector.broadcast %c0_i32_51 : i32 to vector<8x128xi32>
      %93 = arith.cmpi eq, %90, %92 : vector<8x128xi32>
      %c0_i32_52 = arith.constant 0 : i32
      %94 = vector.broadcast %c0_i32_52 : i32 to vector<8x128xi32>
      %95 = arith.cmpi eq, %91, %94 : vector<8x128xi32>
      %96 = arith.andi %93, %95 : vector<8x128xi1>
      %c0_i32_53 = arith.constant 0 : i32
      %97 = vector.broadcast %c0_i32_53 : i32 to vector<8x128xi32>
      %98 = arith.cmpi eq, %90, %97 : vector<8x128xi32>
      %c1_i32 = arith.constant 1 : i32
      %99 = vector.broadcast %c1_i32 : i32 to vector<8x128xi32>
      %100 = arith.cmpi eq, %91, %99 : vector<8x128xi32>
      %101 = arith.andi %98, %100 : vector<8x128xi1>
      %cst_54 = arith.constant 0.000000e+00 : f32
      %102 = vector.broadcast %89 : f32 to vector<8x128xf32>
      %103 = vector.broadcast %cst_54 : f32 to vector<8x128xf32>
      %104 = arith.select %101, %102, %103 : vector<8x128xi1>, vector<8x128xf32>
      %105 = vector.broadcast %83 : f32 to vector<8x128xf32>
      %106 = arith.select %96, %105, %104 : vector<8x128xi1>, vector<8x128xf32>
      %c0_55 = arith.constant 0 : index
      %c0_56 = arith.constant 0 : index
      %107 = vector.load %arg6[%c0_55, %c0_56] : memref<8x128xf32, #tpu.memory_space<vmem>>, vector<8x128xf32>
      tpu.vector_store %arg6[%c0_55, %c0_56], %106 {strides = array<i32>} : memref<8x128xf32, #tpu.memory_space<vmem>>, vector<8x128xf32>,
    } else {
    }
    return
  }
  func.func @transform_0(%arg0: i32, %arg1: i32) -> (i32, i32) {
    %c1_i32 = arith.constant 1 : i32
    %0 = arith.muli %arg0, %c1_i32 : i32
    %1 = arith.addi %0, %arg1 : i32
    %c0_i32 = arith.constant 0 : i32
    %c0_i32_0 = arith.constant 0 : i32
    return %c0_i32, %1 : i32, i32
  }
  func.func @transform_1(%arg0: i32, %arg1: i32) -> (i32, i32) {
    %c1_i32 = arith.constant 1 : i32
    %0 = arith.muli %arg0, %c1_i32 : i32
    %1 = arith.addi %0, %arg1 : i32
    %c0_i32 = arith.constant 0 : i32
    %c0_i32_0 = arith.constant 0 : i32
    return %c0_i32, %1 : i32, i32
  }
  func.func @transform_2(%arg0: i32, %arg1: i32) -> (i32, i32) {
    %c0_i32 = arith.constant 0 : i32
    %c0_i32_0 = arith.constant 0 : i32
    %c0_i32_1 = arith.constant 0 : i32
    return %c0_i32, %c0_i32_0 : i32, i32
  }
  func.func @transform_3(%arg0: i32, %arg1: i32) -> (i32, i32) {
    %c0_i32 = arith.constant 0 : i32
    %c0_i32_0 = arith.constant 0 : i32
    %c0_i32_1 = arith.constant 0 : i32
    return %c0_i32, %c0_i32_0 : i32, i32
  }
  func.func @transform_4(%arg0: i32, %arg1: i32) -> (i32, i32) {
    %c0_i32 = arith.constant 0 : i32
    %c0_i32_0 = arith.constant 0 : i32
    return %arg0, %c0_i32 : i32, i32
  }
}

</mosaic_0001>

<llo_original>
// kernel: tpu_custom_call.1
$region0: #{tpu_custom_call.1}
  #allocation0 [shape = 'u32[]', space=smem, size = 0x4, offset = 0x4, fixed_abs, tag = 'smem constant byte address 0x4 - core index']
  #allocation1 [shape = 'u32[144,128]{1,0:T(1,128)}', space=vmem, size = 0x12000, scoped, tag = 'internal scratch']
  #allocation2 [shape = 'f32[16,8]{1,0:T(8,128)}', space=vmem, size = 0x2000, scoped, tag = 'scratch operand']
  #allocation3 [shape = 'f32[8,8]{1,0:T(8,128)}', space=vmem, size = 0x1000, scoped, tag = 'scratch operand']
  %s0 = inlined_call_operand.vmem [shape: f32[16,8], index: 0, kind: input, shape index: {}]
  %s1 = inlined_call_operand.vmem [shape: f32[8,8], index: 1, kind: input, shape index: {}]
  %s2 = inlined_call_operand.vmem [shape: f32[96,32], index: 2, kind: input, shape index: {}]
  %s3 = inlined_call_operand.vmem [shape: f32[96,1], index: 3, kind: input, shape index: {}]
  %s4 = inlined_call_operand.hbm [shape: f32[8,128], index: 4, kind: output, shape index: {}]
  %s5 = sld [smem:[#allocation0]]
  $region34: #{tpu_custom_call.1} parent=0
    _
  %s7 = ssub.s32 1, %s5
  %s8 = scalar_select 0, %s7, %s5
  $region1: #{tpu_custom_call.1} parent=0
    #allocation4 [shape = 'u8[4096]{0}', space=vmem, size = 0x1000, scoped, tag = 'output window, operand 0, single buffered']
    #allocation5 [shape = 's32[1]{0}', space=sflag, size = 0x4, scoped, tag = 'scoped memory for tpu_custom_call.1']
    %9 = vsyncpa [#allocation5], 0
    // Predicated region
    $region2: #{tpu_custom_call.1} parent=1 // pred_check
      _
    $region3: #{tpu_custom_call.1} parent=1 // pred_check_branch
      %11 = sbr.rel (0) target = $region5
    $region4: #{tpu_custom_call.1} parent=1 // pred_region
      %s12 = sadd.s32 0, 0
      %p13 = scmp.lt.s32.totalorder %s12, 0
      %s14 = scalar_select %p13, %s12, 0
      %s15 = smul.addr %s14, 8
      %s16 = scalar_lea.vmem %s0, %s15
      %s17 = sadd.s32 0, 0
    $region5: #{tpu_custom_call.1} parent=1 // pred_fallthru
      _
    // Predicated region
    $region6: #{tpu_custom_call.1} parent=1 // pred_check
      _
    $region7: #{tpu_custom_call.1} parent=1 // pred_check_branch
      %19 = sbr.rel (0) target = $region9
    $region8: #{tpu_custom_call.1} parent=1 // pred_region
      %s20 = sadd.s32 0, 0
      %p21 = scmp.lt.s32.totalorder %s20, 0
      %s22 = scalar_select %p21, %s20, 0
      %s23 = smul.addr %s22, 8
      %s24 = scalar_lea.vmem %s1, %s23
      %s25 = sadd.s32 0, 0
    $region9: #{tpu_custom_call.1} parent=1 // pred_fallthru
      _
    // Predicated region
    $region10: #{tpu_custom_call.1} parent=1 // pred_check
      _
    $region11: #{tpu_custom_call.1} parent=1 // pred_check_branch
      %27 = sbr.rel (0) target = $region13
    $region12: #{tpu_custom_call.1} parent=1 // pred_region
      _
    $region13: #{tpu_custom_call.1} parent=1 // pred_fallthru
      _
    // Predicated region
    $region14: #{tpu_custom_call.1} parent=1 // pred_check
      _
    $region15: #{tpu_custom_call.1} parent=1 // pred_check_branch
      %29 = sbr.rel (0) target = $region17
    $region16: #{tpu_custom_call.1} parent=1 // pred_region
      _
    $region17: #{tpu_custom_call.1} parent=1 // pred_fallthru
      _
    %s30 = sadd.s32 0, 0
    %p31 = scmp.lt.s32.totalorder %s30, 0
    %s32 = scalar_select %p31, %s30, 0
    %s33 = smul.addr %s32, 8
    %s34 = scalar_lea.vmem %s0, %s33
    %s35 = sadd.s32 0, 0
    %p36 = scmp.lt.s32.totalorder %s35, 0
    %s37 = scalar_select %p36, %s35, 0
    %s38 = smul.addr %s37, 8
    %s39 = scalar_lea.vmem %s1, %s38
    %s40 = sadd.s32 0, 0
    %p41 = scmp.lt.s32.totalorder %s40, 0
    %s42 = scalar_select %p41, %s40, 0
    %s43 = smul.addr %s42, 8
    %s44 = scalar_lea.vmem %s0, %s43
    %s45 = sadd.s32 0, 0
    %s46 = sadd.s32 0, 0
    %p47 = scmp.lt.s32.totalorder %s46, 0
    %s48 = scalar_select %p47, %s46, 0
    %s49 = smul.addr %s48, 8
    %s50 = scalar_lea.vmem %s1, %s49
    %s51 = sadd.s32 0, 0
    %p52 = scmp.eq.s32.totalorder 0, 0
    // Predicated region
    $region18: #{tpu_custom_call.1} parent=1 // pred_check
      %p53 = pneg %p52
    $region19: #{tpu_custom_call.1} parent=1 // pred_check_branch
      %55 = sbr.rel (%p53) target = $region21
    $region20: #{tpu_custom_call.1} parent=1 // pred_region
      %vm56 = vcmask 64512
      %57 = vst.msk [vmem:[#allocation2] sm:$0xff] %vm56, 0.0
      %58 = vst.msk [vmem:[#allocation2 + $0x8] sm:$0xff] %vm56, 0.0
      %59 = vst.msk [vmem:[#allocation3] sm:$0xff] %vm56, 0.0
    $region21: #{tpu_custom_call.1} parent=1 // pred_fallthru
      _
    %v60 = vld [vmem:[%s44] sm:$0xff]
    %v61 = vld [vmem:[%s44 + $0x8] sm:$0xff]
    %v62 = vld [vmem:[%s50] sm:$0xff]
    %v63 = vld [vmem:[%s2] sm:$0xff]
    %v64 = vld [vmem:[%s2 + $0x8] sm:$0xff]
    %v65 = vld [vmem:[%s2 + $0x10] sm:$0xff]
    %v66 = vld [vmem:[%s2 + $0x18] sm:$0xff]
    %v67 = vld [vmem:[%s3] sm:$0xff]
    %v68 = vld [vmem:[%s3 + $0x8] sm:$0xff]
    %v69 = vld [vmem:[%s3 + $0x10] sm:$0xff]
    %v70 = vld [vmem:[%s3 + $0x18] sm:$0xff]
    %72 = vset.pattern.permute.xlu0 0
    %73 = vperm.xlu0 %72, %v67
    %v74 = vpop.permute.xlu0 %73
    %77 = vset.pattern.permute.xlu0 0
    %78 = vperm.xlu0 %77, %v68
    %v79 = vpop.permute.xlu0 %78
    %82 = vset.pattern.permute.xlu0 0
    %83 = vperm.xlu0 %82, %v69
    %v84 = vpop.permute.xlu0 %83
    %87 = vset.pattern.permute.xlu0 0
    %88 = vperm.xlu0 %87, %v70
    %v89 = vpop.permute.xlu0 %88
    %vm91 = vcmask 130048
    %v93 = vsel %vm91, %v63, 0
    %v96 = vsel %vm91, %v64, 0
    %v99 = vsel %vm91, %v65, 0
    %v102 = vsel %vm91, %v66, 0
    %104 = vmatprep.subr.mxu0 0.0
    %105 = vmatpush1.msra.mxu0 0.0
    %106 = vmatprep.subr.mxu0 0.0
    %107 = vmatpush1.msra.mxu0 0.0
    %108 = vmatprep.subr.mxu0 0.0
    %109 = vmatpush1.msra.mxu0 0.0
    %110 = vmatprep.subr.mxu0 0.0
    %111 = vmatpush1.msra.mxu0 0.0
    %112 = vmatprep.subr.mxu0 0.0
    %113 = vmatpush1.msra.mxu0 0.0
    %114 = vmatprep.subr.mxu0 0.0
    %115 = vmatpush1.msra.mxu0 0.0
    %116 = vmatprep.subr.mxu0 0.0
    %117 = vmatpush1.msra.mxu0 0.0
    %118 = vmatprep.subr.mxu0 0.0
    %119 = vmatpush1.msra.mxu0 0.0
    %120 = vmatprep.subr.mxu0 0.0
    %121 = vmatpush1.msra.mxu0 0.0
    %122 = vmatprep.subr.mxu0 0.0
    %123 = vmatpush1.msra.mxu0 0.0
    %124 = vmatprep.subr.mxu0 0.0
    %125 = vmatpush1.msra.mxu0 0.0
    %126 = vmatprep.subr.mxu0 0.0
    %127 = vmatpush1.msra.mxu0 0.0
    %128 = vmatprep.subr.mxu0 0.0
    %129 = vmatpush1.msra.mxu0 0.0
    %130 = vmatprep.subr.mxu0 0.0
    %131 = vmatpush1.msra.mxu0 0.0
    %132 = vmatprep.subr.mxu0 0.0
    %133 = vmatpush1.msra.mxu0 %v61
    %134 = vmatprep.subr.mxu0 0.0
    %135 = vmatpush1.msra.mxu0 %v60
    %136 = vmatprep.subr.mxu0 0.0
    %137 = vmatpush2.msra.mxu0 0.0
    %138 = vmatprep.subr.mxu0 0.0
    %139 = vmatpush2.msra.mxu0 0.0
    %140 = vmatprep.subr.mxu0 0.0
    %141 = vmatpush2.msra.mxu0 0.0
    %142 = vmatprep.subr.mxu0 0.0
    %143 = vmatpush2.msra.mxu0 0.0
    %144 = vmatprep.subr.mxu0 0.0
    %145 = vmatpush2.msra.mxu0 0.0
    %146 = vmatprep.subr.mxu0 0.0
    %147 = vmatpush2.msra.mxu0 0.0
    %148 = vmatprep.subr.mxu0 0.0
    %149 = vmatpush2.msra.mxu0 0.0
    %150 = vmatprep.subr.mxu0 0.0
    %151 = vmatpush2.msra.mxu0 0.0
    %152 = vmatprep.subr.mxu0 0.0
    %153 = vmatpush2.msra.mxu0 0.0
    %154 = vmatprep.subr.mxu0 0.0
    %155 = vmatpush2.msra.mxu0 0.0
    %156 = vmatprep.subr.mxu0 0.0
    %157 = vmatpush2.msra.mxu0 0.0
    %158 = vmatprep.subr.mxu0 0.0
    %159 = vmatpush2.msra.mxu0 0.0
    %160 = vmatprep.subr.mxu0 0.0
    %161 = vmatpush2.msra.mxu0 0.0
    %162 = vmatprep.subr.mxu0 0.0
    %163 = vmatpush2.msra.mxu0 0.0
    %164 = vmatprep.subr.mxu0 0.0
    %165 = vmatpush2.msra.mxu0 0.0
    %166 = vmatprep.subr.mxu0 0.0
    %167 = vmatpush2.msra.mxu0 0.0
    %168 = vmatprep.mubr.f32.mxu0 0.0
    %169 = vmatmul.mubr.f32.gmra.mxu0 %v93
    %v170 = vpop.f32.mrf.mxu0
    %v171 = vadd.f32 %v74, %v170
    %v172 = vpop.f32.mrf.mxu0
    %173 = vmatprep.mubr.f32.mxu0 0.0
    %174 = vmatmul.mubr.f32.gmra.mxu0 %v96
    %v175 = vpop.f32.mrf.mxu0
    %v176 = vadd.f32 %v79, %v175
    %v177 = vpop.f32.mrf.mxu0
    %178 = vmatprep.mubr.f32.mxu0 0.0
    %179 = vmatmul.mubr.f32.gmra.mxu0 %v99
    %v180 = vpop.f32.mrf.mxu0
    %v181 = vadd.f32 %v84, %v180
    %v182 = vpop.f32.mrf.mxu0
    %183 = vmatprep.mubr.f32.mxu0 0.0
    %184 = vmatmul.mubr.f32.gmra.mxu0 %v102
    %v185 = vpop.f32.mrf.mxu0
    %v186 = vadd.f32 %v89, %v185
    %v187 = vpop.f32.mrf.mxu0
    %188 = vdwg.mxu0
    %v189 = vmax.f32 %v171, 0.0
    %v190 = vmax.f32 %v176, 0.0
    %v191 = vmax.f32 %v181, 0.0
    %v192 = vmax.f32 %v186, 0.0
    %v193 = vld [vmem:[%s2 + $0x20] sm:$0xff]
    %v194 = vld [vmem:[%s2 + $0x28] sm:$0xff]
    %v195 = vld [vmem:[%s3 + $0x20] sm:$0xff]
    %v196 = vld [vmem:[%s3 + $0x28] sm:$0xff]
    %198 = vset.pattern.permute.xlu0 0
    %199 = vperm.xlu0 %198, %v195
    %v200 = vpop.permute.xlu0 %199
    %203 = vset.pattern.permute.xlu0 0
    %204 = vperm.xlu0 %203, %v196
    %v205 = vpop.permute.xlu0 %204
    %vm207 = vcmask 261120
    %v209 = vsel %vm207, %v193, 0
    %v212 = vsel %vm207, %v194, 0
    %214 = vmatprep.subr.mxu0 0.0
    %215 = vmatpush1.msra.mxu0 0.0
    %216 = vmatprep.subr.mxu0 0.0
    %217 = vmatpush1.msra.mxu0 0.0
    %218 = vmatprep.subr.mxu0 0.0
    %219 = vmatpush1.msra.mxu0 0.0
    %220 = vmatprep.subr.mxu0 0.0
    %221 = vmatpush1.msra.mxu0 0.0
    %222 = vmatprep.subr.mxu0 0.0
    %223 = vmatpush1.msra.mxu0 0.0
    %224 = vmatprep.subr.mxu0 0.0
    %225 = vmatpush1.msra.mxu0 0.0
    %226 = vmatprep.subr.mxu0 0.0
    %227 = vmatpush1.msra.mxu0 0.0
    %228 = vmatprep.subr.mxu0 0.0
    %229 = vmatpush1.msra.mxu0 0.0
    %230 = vmatprep.subr.mxu0 0.0
    %231 = vmatpush1.msra.mxu0 0.0
    %232 = vmatprep.subr.mxu0 0.0
    %233 = vmatpush1.msra.mxu0 0.0
    %234 = vmatprep.subr.mxu0 0.0
    %235 = vmatpush1.msra.mxu0 0.0
    %236 = vmatprep.subr.mxu0 0.0
    %237 = vmatpush1.msra.mxu0 0.0
    %238 = vmatprep.subr.mxu0 0.0
    %239 = vmatpush1.msra.mxu0 %v192
    %240 = vmatprep.subr.mxu0 0.0
    %241 = vmatpush1.msra.mxu0 %v191
    %242 = vmatprep.subr.mxu0 0.0
    %243 = vmatpush1.msra.mxu0 %v190
    %244 = vmatprep.subr.mxu0 0.0
    %245 = vmatpush1.msra.mxu0 %v189
    %246 = vmatprep.subr.mxu0 0.0
    %247 = vmatpush2.msra.mxu0 0.0
    %248 = vmatprep.subr.mxu0 0.0
    %249 = vmatpush2.msra.mxu0 0.0
    %250 = vmatprep.subr.mxu0 0.0
    %251 = vmatpush2.msra.mxu0 0.0
    %252 = vmatprep.subr.mxu0 0.0
    %253 = vmatpush2.msra.mxu0 0.0
    %254 = vmatprep.subr.mxu0 0.0
    %255 = vmatpush2.msra.mxu0 0.0
    %256 = vmatprep.subr.mxu0 0.0
    %257 = vmatpush2.msra.mxu0 0.0
    %258 = vmatprep.subr.mxu0 0.0
    %259 = vmatpush2.msra.mxu0 0.0
    %260 = vmatprep.subr.mxu0 0.0
    %261 = vmatpush2.msra.mxu0 0.0
    %262 = vmatprep.subr.mxu0 0.0
    %263 = vmatpush2.msra.mxu0 0.0
    %264 = vmatprep.subr.mxu0 0.0
    %265 = vmatpush2.msra.mxu0 0.0
    %266 = vmatprep.subr.mxu0 0.0
    %267 = vmatpush2.msra.mxu0 0.0
    %268 = vmatprep.subr.mxu0 0.0
    %269 = vmatpush2.msra.mxu0 0.0
    %270 = vmatprep.subr.mxu0 0.0
    %271 = vmatpush2.msra.mxu0 0.0
    %272 = vmatprep.subr.mxu0 0.0
    %273 = vmatpush2.msra.mxu0 0.0
    %274 = vmatprep.subr.mxu0 0.0
    %275 = vmatpush2.msra.mxu0 0.0
    %276 = vmatprep.subr.mxu0 0.0
    %277 = vmatpush2.msra.mxu0 0.0
    %278 = vmatprep.mubr.f32.mxu0 0.0
    %279 = vmatmul.mubr.f32.gmra.mxu0 %v209
    %v280 = vpop.f32.mrf.mxu0
    %v281 = vadd.f32 %v200, %v280
    %v282 = vpop.f32.mrf.mxu0
    %283 = vmatprep.mubr.f32.mxu0 0.0
    %284 = vmatmul.mubr.f32.gmra.mxu0 %v212
    %v285 = vpop.f32.mrf.mxu0
    %v286 = vadd.f32 %v205, %v285
    %v287 = vpop.f32.mrf.mxu0
    %288 = vdwg.mxu0
    %v289 = vmul.f32 %v286, 0.5
    %v290 = vmul.f32 %v289, 1.442695
    %v291 = vpow.pop %v290
    %v292 = vmul.f32 %v291, %v62
    %v293 = vadd.f32 %v281, %v292
    %v294 = vld [vmem:[%s2 + $0x30] sm:$0xff]
    %v295 = vld [vmem:[%s2 + $0x38] sm:$0xff]
    %v296 = vld [vmem:[%s2 + $0x40] sm:$0xff]
    %v297 = vld [vmem:[%s2 + $0x48] sm:$0xff]
    %v298 = vld [vmem:[%s3 + $0x30] sm:$0xff]
    %v299 = vld [vmem:[%s3 + $0x38] sm:$0xff]
    %v300 = vld [vmem:[%s3 + $0x40] sm:$0xff]
    %v301 = vld [vmem:[%s3 + $0x48] sm:$0xff]
    %303 = vset.pattern.permute.xlu0 0
    %304 = vperm.xlu0 %303, %v298
    %v305 = vpop.permute.xlu0 %304
    %308 = vset.pattern.permute.xlu0 0
    %309 = vperm.xlu0 %308, %v299
    %v310 = vpop.permute.xlu0 %309
    %313 = vset.pattern.permute.xlu0 0
    %314 = vperm.xlu0 %313, %v300
    %v315 = vpop.permute.xlu0 %314
    %318 = vset.pattern.permute.xlu0 0
    %319 = vperm.xlu0 %318, %v301
    %v320 = vpop.permute.xlu0 %319
    %vm322 = vcmask 64512
    %v324 = vsel %vm322, %v294, 0
    %v327 = vsel %vm322, %v295, 0
    %v330 = vsel %vm322, %v296, 0
    %v333 = vsel %vm322, %v297, 0
    %335 = vmatprep.subr.mxu0 0.0
    %336 = vmatpush1.msra.mxu0 0.0
    %337 = vmatprep.subr.mxu0 0.0
    %338 = vmatpush1.msra.mxu0 0.0
    %339 = vmatprep.subr.mxu0 0.0
    %340 = vmatpush1.msra.mxu0 0.0
    %341 = vmatprep.subr.mxu0 0.0
    %342 = vmatpush1.msra.mxu0 0.0
    %343 = vmatprep.subr.mxu0 0.0
    %344 = vmatpush1.msra.mxu0 0.0
    %345 = vmatprep.subr.mxu0 0.0
    %346 = vmatpush1.msra.mxu0 0.0
    %347 = vmatprep.subr.mxu0 0.0
    %348 = vmatpush1.msra.mxu0 0.0
    %349 = vmatprep.subr.mxu0 0.0
    %350 = vmatpush1.msra.mxu0 0.0
    %351 = vmatprep.subr.mxu0 0.0
    %352 = vmatpush1.msra.mxu0 0.0
    %353 = vmatprep.subr.mxu0 0.0
    %354 = vmatpush1.msra.mxu0 0.0
    %355 = vmatprep.subr.mxu0 0.0
    %356 = vmatpush1.msra.mxu0 0.0
    %357 = vmatprep.subr.mxu0 0.0
    %358 = vmatpush1.msra.mxu0 0.0
    %359 = vmatprep.subr.mxu0 0.0
    %360 = vmatpush1.msra.mxu0 0.0
    %361 = vmatprep.subr.mxu0 0.0
    %362 = vmatpush1.msra.mxu0 0.0
    %363 = vmatprep.subr.mxu0 0.0
    %364 = vmatpush1.msra.mxu0 0.0
    %365 = vmatprep.subr.mxu0 0.0
    %366 = vmatpush1.msra.mxu0 %v293
    %367 = vmatprep.subr.mxu0 0.0
    %368 = vmatpush2.msra.mxu0 0.0
    %369 = vmatprep.subr.mxu0 0.0
    %370 = vmatpush2.msra.mxu0 0.0
    %371 = vmatprep.subr.mxu0 0.0
    %372 = vmatpush2.msra.mxu0 0.0
    %373 = vmatprep.subr.mxu0 0.0
    %374 = vmatpush2.msra.mxu0 0.0
    %375 = vmatprep.subr.mxu0 0.0
    %376 = vmatpush2.msra.mxu0 0.0
    %377 = vmatprep.subr.mxu0 0.0
    %378 = vmatpush2.msra.mxu0 0.0
    %379 = vmatprep.subr.mxu0 0.0
    %380 = vmatpush2.msra.mxu0 0.0
    %381 = vmatprep.subr.mxu0 0.0
    %382 = vmatpush2.msra.mxu0 0.0
    %383 = vmatprep.subr.mxu0 0.0
    %384 = vmatpush2.msra.mxu0 0.0
    %385 = vmatprep.subr.mxu0 0.0
    %386 = vmatpush2.msra.mxu0 0.0
    %387 = vmatprep.subr.mxu0 0.0
    %388 = vmatpush2.msra.mxu0 0.0
    %389 = vmatprep.subr.mxu0 0.0
    %390 = vmatpush2.msra.mxu0 0.0
    %391 = vmatprep.subr.mxu0 0.0
    %392 = vmatpush2.msra.mxu0 0.0
    %393 = vmatprep.subr.mxu0 0.0
    %394 = vmatpush2.msra.mxu0 0.0
    %395 = vmatprep.subr.mxu0 0.0
    %396 = vmatpush2.msra.mxu0 0.0
    %397 = vmatprep.subr.mxu0 0.0
    %398 = vmatpush2.msra.mxu0 0.0
    %399 = vmatprep.mubr.f32.mxu0 0.0
    %400 = vmatmul.mubr.f32.gmra.mxu0 %v324
    %v401 = vpop.f32.mrf.mxu0
    %v402 = vadd.f32 %v305, %v401
    %v403 = vpop.f32.mrf.mxu0
    %404 = vmatprep.mubr.f32.mxu0 0.0
    %405 = vmatmul.mubr.f32.gmra.mxu0 %v327
    %v406 = vpop.f32.mrf.mxu0
    %v407 = vadd.f32 %v310, %v406
    %v408 = vpop.f32.mrf.mxu0
    %409 = vmatprep.mubr.f32.mxu0 0.0
    %410 = vmatmul.mubr.f32.gmra.mxu0 %v330
    %v411 = vpop.f32.mrf.mxu0
    %v412 = vadd.f32 %v315, %v411
    %v413 = vpop.f32.mrf.mxu0
    %414 = vmatprep.mubr.f32.mxu0 0.0
    %415 = vmatmul.mubr.f32.gmra.mxu0 %v333
    %v416 = vpop.f32.mrf.mxu0
    %v417 = vadd.f32 %v320, %v416
    %v418 = vpop.f32.mrf.mxu0
    %419 = vdwg.mxu0
    %v420 = vmax.f32 %v402, 0.0
    %v421 = vmax.f32 %v407, 0.0
    %v422 = vmax.f32 %v412, 0.0
    %v423 = vmax.f32 %v417, 0.0
    %v424 = vld [vmem:[%s2 + $0x50] sm:$0xff]
    %v425 = vld [vmem:[%s2 + $0x58] sm:$0xff]
    %v426 = vld [vmem:[%s3 + $0x50] sm:$0xff]
    %v427 = vld [vmem:[%s3 + $0x58] sm:$0xff]
    %429 = vset.pattern.permute.xlu0 0
    %430 = vperm.xlu0 %429, %v426
    %v431 = vpop.permute.xlu0 %430
    %434 = vset.pattern.permute.xlu0 0
    %435 = vperm.xlu0 %434, %v427
    %v436 = vpop.permute.xlu0 %435
    %v439 = vsel %vm207, %v424, 0
    %v442 = vsel %vm207, %v425, 0
    %444 = vmatprep.subr.mxu0 0.0
    %445 = vmatpush1.msra.mxu0 0.0
    %446 = vmatprep.subr.mxu0 0.0
    %447 = vmatpush1.msra.mxu0 0.0
    %448 = vmatprep.subr.mxu0 0.0
    %449 = vmatpush1.msra.mxu0 0.0
    %450 = vmatprep.subr.mxu0 0.0
    %451 = vmatpush1.msra.mxu0 0.0
    %452 = vmatprep.subr.mxu0 0.0
    %453 = vmatpush1.msra.mxu0 0.0
    %454 = vmatprep.subr.mxu0 0.0
    %455 = vmatpush1.msra.mxu0 0.0
    %456 = vmatprep.subr.mxu0 0.0
    %457 = vmatpush1.msra.mxu0 0.0
    %458 = vmatprep.subr.mxu0 0.0
    %459 = vmatpush1.msra.mxu0 0.0
    %460 = vmatprep.subr.mxu0 0.0
    %461 = vmatpush1.msra.mxu0 0.0
    %462 = vmatprep.subr.mxu0 0.0
    %463 = vmatpush1.msra.mxu0 0.0
    %464 = vmatprep.subr.mxu0 0.0
    %465 = vmatpush1.msra.mxu0 0.0
    %466 = vmatprep.subr.mxu0 0.0
    %467 = vmatpush1.msra.mxu0 0.0
    %468 = vmatprep.subr.mxu0 0.0
    %469 = vmatpush1.msra.mxu0 %v423
    %470 = vmatprep.subr.mxu0 0.0
    %471 = vmatpush1.msra.mxu0 %v422
    %472 = vmatprep.subr.mxu0 0.0
    %473 = vmatpush1.msra.mxu0 %v421
    %474 = vmatprep.subr.mxu0 0.0
    %475 = vmatpush1.msra.mxu0 %v420
    %476 = vmatprep.subr.mxu0 0.0
    %477 = vmatpush2.msra.mxu0 0.0
    %478 = vmatprep.subr.mxu0 0.0
    %479 = vmatpush2.msra.mxu0 0.0
    %480 = vmatprep.subr.mxu0 0.0
    %481 = vmatpush2.msra.mxu0 0.0
    %482 = vmatprep.subr.mxu0 0.0
    %483 = vmatpush2.msra.mxu0 0.0
    %484 = vmatprep.subr.mxu0 0.0
    %485 = vmatpush2.msra.mxu0 0.0
    %486 = vmatprep.subr.mxu0 0.0
    %487 = vmatpush2.msra.mxu0 0.0
    %488 = vmatprep.subr.mxu0 0.0
    %489 = vmatpush2.msra.mxu0 0.0
    %490 = vmatprep.subr.mxu0 0.0
    %491 = vmatpush2.msra.mxu0 0.0
    %492 = vmatprep.subr.mxu0 0.0
    %493 = vmatpush2.msra.mxu0 0.0
    %494 = vmatprep.subr.mxu0 0.0
    %495 = vmatpush2.msra.mxu0 0.0
    %496 = vmatprep.subr.mxu0 0.0
    %497 = vmatpush2.msra.mxu0 0.0
    %498 = vmatprep.subr.mxu0 0.0
    %499 = vmatpush2.msra.mxu0 0.0
    %500 = vmatprep.subr.mxu0 0.0
    %501 = vmatpush2.msra.mxu0 0.0
    %502 = vmatprep.subr.mxu0 0.0
    %503 = vmatpush2.msra.mxu0 0.0
    %504 = vmatprep.subr.mxu0 0.0
    %505 = vmatpush2.msra.mxu0 0.0
    %506 = vmatprep.subr.mxu0 0.0
    %507 = vmatpush2.msra.mxu0 0.0
    %508 = vmatprep.mubr.f32.mxu0 0.0
    %509 = vmatmul.mubr.f32.gmra.mxu0 %v439
    %v510 = vpop.f32.mrf.mxu0
    %v511 = vadd.f32 %v431, %v510
    %v512 = vpop.f32.mrf.mxu0
    %513 = vmatprep.mubr.f32.mxu0 0.0
    %514 = vmatmul.mubr.f32.gmra.mxu0 %v442
    %v515 = vpop.f32.mrf.mxu0
    %v516 = vadd.f32 %v436, %v515
    %v517 = vpop.f32.mrf.mxu0
    %518 = vdwg.mxu0
    %v519 = vsub.f32 0.0, %v511
    %v520 = vsub.f32 0.0, %v516
    %v521 = vmax.f32 %v519, 0.0
    %v522 = vmax.f32 %v520, 0.0
    %v523 = vand.u32 2147483647, %v511
    %v524 = vand.u32 2147483647, %v516
    %v525 = vsub.f32 0.0, %v523
    %v526 = vsub.f32 0.0, %v524
    %v527 = vmul.f32 %v525, 1.442695
    %v528 = vpow.pop %v527
    %v529 = vmul.f32 %v526, 1.442695
    %v530 = vpow.pop %v529
    %v531 = vadd.f32 %v528, 1.0
    %v532 = vadd.f32 %v530, 1.0
    %v533 = vlog2.pop %v531
    %v534 = vmul.f32 %v533, 0.6931472
    %v535 = vlog2.pop %v532
    %v536 = vmul.f32 %v535, 0.6931472
    %v537 = vadd.f32 %v521, %v534
    %v538 = vadd.f32 %v522, %v536
    %v539 = vadd.f32 %v511, %v537
    %v540 = vadd.f32 %v516, %v538
    %v541 = vsub.f32 0.0, %v537
    %v542 = vsub.f32 0.0, %v538
    %v543 = vmax.f32 %v541, -100.0
    %v544 = vmax.f32 %v542, -100.0
    %v545 = vsub.f32 0.0, %v539
    %v546 = vsub.f32 0.0, %v540
    %v547 = vmax.f32 %v545, -100.0
    %v548 = vmax.f32 %v546, -100.0
    %v549 = vld [vmem:[#allocation2] sm:$0xff]
    %v550 = vld [vmem:[#allocation2 + $0x8] sm:$0xff]
    %v551 = vmul.f32 %v60, %v543
    %v552 = vmul.f32 %v61, %v544
    %v553 = vsub.f32 1.0, %v60
    %v554 = vsub.f32 1.0, %v61
    %v555 = vmul.f32 %v553, %v547
    %v556 = vmul.f32 %v554, %v548
    %v557 = vadd.f32 %v551, %v555
    %v558 = vadd.f32 %v552, %v556
    %v559 = vsub.f32 0.0, %v557
    %v560 = vsub.f32 0.0, %v558
    %v561 = vadd.f32 %v549, %v559
    %v562 = vadd.f32 %v550, %v560
    %563 = vst.msk [vmem:[#allocation2] sm:$0xff] %vm322, %v561
    %564 = vst.msk [vmem:[#allocation2 + $0x8] sm:$0xff] %vm322, %v562
    %v565 = vld [vmem:[#allocation3] sm:$0xff]
    %v566 = vmul.f32 %v291, %v291
    %v567 = vmul.f32 %v281, %v281
    %v568 = vadd.f32 %v566, %v567
    %v569 = vsub.f32 %v568, 1.0
    %v570 = vsub.f32 %v569, %v286
    %v571 = vadd.f32 %v565, %v570
    %572 = vst.msk [vmem:[#allocation3] sm:$0xff] %vm322, %v571
    // Predicated region
    $region22: #{tpu_custom_call.1} parent=1 // pred_check
      %p573 = pneg %p52
    $region23: #{tpu_custom_call.1} parent=1 // pred_check_branch
      %575 = sbr.rel (%p573) target = $region25
    $region24: #{tpu_custom_call.1} parent=1 // pred_region
      %v576 = vld [vmem:[#allocation2] sm:$0xff]
      %v577 = vld [vmem:[#allocation2 + $0x8] sm:$0xff]
      %v578 = vsel %vm322, %v576, 0.0
      %v579 = vsel %vm322, %v577, 0.0
      %v580 = vadd.f32 %v578, %v579
      %581 = vadd.xlane.f32.xlu0 %v580
      %v582 = vpop.xlane.xlu0 %581
      %v583 = vrot.slane %v582, 4
      %v584 = vadd.f32 %v582, %v583
      %v585 = vrot.slane %v584, 2
      %v586 = vadd.f32 %v584, %v585
      %v587 = vrot.slane %v586, 1
      %v588 = vadd.f32 %v586, %v587
      %s589 = vtos %v588
      %v590 = vld [vmem:[#allocation3] sm:$0xff]
      %v591 = vsel %vm322, %v590, 0.0
      %592 = vadd.xlane.f32.xlu0 %v591
      %v593 = vpop.xlane.xlu0 %592
      %v594 = vrot.slane %v593, 4
      %v595 = vadd.f32 %v593, %v594
      %v596 = vrot.slane %v595, 2
      %v597 = vadd.f32 %v595, %v596
      %v598 = vrot.slane %v597, 1
      %v599 = vadd.f32 %v597, %v598
      %s600 = vtos %v599
      %s601 = smul.f32 %s600, 0.5
      %v602 = vlaneseq
      %v603 = vshrl.u32 %v602, 7
      %v604 = vlaneseq
      %v605 = vand.u32 %v604, 127
      %vm606 = vcmp.eq.s32.totalorder %v603, 0
      %vm607 = vcmp.eq.s32.totalorder %v605, 0
      %vm608 = vmand %vm606, %vm607
      %vm609 = vcmp.eq.s32.totalorder %v605, 1
      %vm610 = vmand %vm606, %vm609
      %v611 = vstv %s601
      %v612 = vsel %vm610, %v611, 0.0
      %v613 = vstv %s589
      %v614 = vsel %vm608, %v613, %v612
      %615 = vst [vmem:[#allocation4] sm:$0xff] %v614
    $region25: #{tpu_custom_call.1} parent=1 // pred_fallthru
      _
    // Predicated region
    $region26: #{tpu_custom_call.1} parent=1 // pred_check
      _
    $region27: #{tpu_custom_call.1} parent=1 // pred_check_branch
      %617 = sbr.rel (0) target = $region29
    $region28: #{tpu_custom_call.1} parent=1 // pred_region
      %s619 = ssub.s32 128, 128
      %620 = vsyncadd [#allocation5], %s619
      %s622 = sshll.u32 [#allocation4], 4
      %s623 = int_to_ptr.vmem [resolvable:$true] %s622
      %625 = dma.vmem_to_hbm [thread:$0]  %s623, 128, %s4, [#allocation5]
    $region29: #{tpu_custom_call.1} parent=1 // pred_fallthru
      _
    // Predicated region
    $region30: #{tpu_custom_call.1} parent=1 // pred_check
      _
    $region31: #{tpu_custom_call.1} parent=1 // pred_check_branch
      %627 = sbr.rel (0) target = $region33
    $region32: #{tpu_custom_call.1} parent=1 // pred_region
      %628 = dma.done [#allocation5], 128
    $region33: #{tpu_custom_call.1} parent=1 // pred_fallthru
      _
    %629 = vsyncpa [#allocation5], 1

</llo_original>
